<compile_context>
chip_gen: v7x
topology: tpu7x:2x2x1
jax: 0.10.0
libtpu: 0.0.40
codegen_flags: <defaults>
</compile_context>

<pallas_src>
import math

import jax
import jax.numpy as jnp
from jax.experimental import pallas as pl
from jax.experimental.pallas import tpu as pltpu


_TARGET_OUT_BLOCK_BYTES = 4 << 20    # ~4 MiB output slab per grid step
_LANE_TILE_CAP_ELEMS = 128 * 1024    # <= 512 KiB (f32) per W_P lane chunk


def _pos_embed_kernel(wp_ref, out_ref):
    # wp_ref:  (1, L_TILE) chunk of the flattened positional row W_P[:seq].
    # out_ref: (B_TILE, L_TILE) output slab covering B_TILE batch elements.
    # One hoisted broadcast per grid step (broadcast_in_dim is not CSE'd).
    out_ref[...] = jnp.broadcast_to(wp_ref[...], out_ref.shape)


def _largest_lane_tile(L: int, cap: int) -> int:
    """Largest chunk that divides L, is a multiple of 128, and is <= cap.

    Falls back to the full length when L is not a multiple of 128 (a block
    extent equal to the full dim is always legal).
    """
    if L <= cap or L % 128 != 0:
        return L
    n = L // 128
    cap_units = max(1, cap // 128)
    best = 1
    d = 1
    while d * d <= n:
        if n % d == 0:
            for c in (d, n // d):
                if best < c <= cap_units:
                    best = c
        d += 1
    return best * 128


def _build_call(batch, L, b_tile, l_tile, dtype, vmem_limit, single_buffer_wp):
    if single_buffer_wp:
        # Constant across the inner batch axis -> no need for double buffering.
        wp_spec = pl.BlockSpec((1, l_tile), lambda l, b: (0, l),
                               pipeline_mode=pl.Buffered(1))
    else:
        wp_spec = pl.BlockSpec((1, l_tile), lambda l, b: (0, l))
    return pl.pallas_call(
        _pos_embed_kernel,
        out_shape=jax.ShapeDtypeStruct((batch, L), dtype),
        grid_spec=pltpu.PrefetchScalarGridSpec(
            num_scalar_prefetch=0,
            # Lane tiles outer, batch tiles inner: the W_P chunk stays constant
            # across the inner axis, so it is fetched once per outer step.
            grid=(L // l_tile, pl.cdiv(batch, b_tile)),
            in_specs=[wp_spec],
            out_specs=pl.BlockSpec((b_tile, l_tile), lambda l, b: (b, l)),
        ),
        compiler_params=pltpu.CompilerParams(
            # No reduction axes; "parallel" lets megacore chips (v7x) split the
            # write-bound grid across both TensorCores.
            dimension_semantics=("parallel", "parallel"),
            vmem_limit_bytes=vmem_limit,
        ),
    )


def positional_embed(tokens: jax.Array, W_P: jax.Array) -> jax.Array:
    """Pallas equivalent of PositionalEmbed.forward.

    tokens: int array (batch, seq) -- only the shape is used.
    W_P:    float32 (ctx_len, d_model) positional embedding table.
    returns float32 (batch, seq, d_model).
    """
    batch, seq = tokens.shape
    ctx_len, d_model = W_P.shape
    assert seq <= ctx_len

    # Wrapper-side slice + flatten into one lane-dense row of length L.
    L = seq * d_model
    w_flat = W_P[:seq].reshape(1, L)
    itemsize = W_P.dtype.itemsize

    # Lane tile: multiple of 128 (or the full dim) so stores are unmasked.
    l_tile = _largest_lane_tile(L, _LANE_TILE_CAP_ELEMS)

    # Batch tile: as many rows as fit a ~4 MiB output block, sublane-aligned,
    # or the full batch (full dim is always a legal block extent).
    rows_fit = max(1, _TARGET_OUT_BLOCK_BYTES // (l_tile * itemsize))
    if rows_fit >= batch:
        b_tile = batch
    else:
        b_tile = min(batch, max(8, (rows_fit // 8) * 8))

    out_block = b_tile * l_tile * itemsize
    in_block = l_tile * itemsize
    # Double-buffered in+out plus headroom; stays under v7x's 64 MiB VMEM.
    vmem_limit = int(min(48 << 20, max(16 << 20, 4 * (out_block + in_block))))

    try:
        out_flat = _build_call(batch, L, b_tile, l_tile, W_P.dtype, vmem_limit,
                               single_buffer_wp=True)(w_flat)
    except Exception:
        # pl.Buffered(1) pipeline mode unavailable -> default double buffering.
        out_flat = _build_call(batch, L, b_tile, l_tile, W_P.dtype, vmem_limit,
                               single_buffer_wp=False)(w_flat)

    return out_flat.reshape(batch, seq, d_model)


if __name__ == "__main__":
    # cfg: ctx_len=16, d_model=32; inputs: batch=2, seq=8
    ctx_len, d_model = 16, 32
    batch, seq = 2, 8

    key = jax.random.PRNGKey(0)
    k_wp, k_tok = jax.random.split(key)

    # Deterministic init matching nn.init.uniform_(W_P, -a, a), a = sqrt(1/d_model)
    a = math.sqrt(1.0 / d_model)
    W_P = jax.random.uniform(
        k_wp, (ctx_len, d_model), dtype=jnp.float32, minval=-a, maxval=a
    )
    tokens = jax.random.randint(k_tok, (batch, seq), 0, 100, dtype=jnp.int32)

    out = positional_embed(tokens, W_P)
    out = jax.block_until_ready(out)

    # Reference: W_P[0:seq] broadcast to (batch, seq, d_model)
    ref = jnp.broadcast_to(W_P[:seq][None, :, :], (batch, seq, d_model))
    assert out.shape == (batch, seq, d_model)
    assert out.dtype == jnp.float32
    assert bool(jnp.array_equal(out, ref))

    print("KERNEL_OK")
</pallas_src>

<mosaic_0001>
module attributes {stable_mosaic.version = 11 : i64} {
  func.func @_pos_embed_kernel(%arg0: i32, %arg1: i32, %arg2: memref<1x256xf32, #tpu.memory_space<vmem>>, %arg3: memref<2x256xf32, #tpu.memory_space<vmem>>) attributes {dimension_semantics = [#tpu.dimension_semantics<parallel>, #tpu.dimension_semantics<parallel>], iteration_bounds = array<i64: 1, 1>, scalar_prefetch = 0 : i64, scratch_operands = 0 : i64, tpu.core_type = #tpu.core_type<tc>, window_params = [{pipeline_mode = #tpu.pipeline_mode<synchronous>, transform_indices = @transform_0, window_bounds = array<i64: 1, 256>}, {transform_indices = @transform_1, window_bounds = array<i64: 2, 256>}]} {
    %c0 = arith.constant 0 : index
    %c0_0 = arith.constant 0 : index
    %0 = vector.load %arg2[%c0, %c0_0] : memref<1x256xf32, #tpu.memory_space<vmem>>, vector<1x256xf32>
    %1 = vector.shape_cast %0 : vector<1x256xf32> to vector<1x256xf32>
    %2 = vector.broadcast %1 : vector<1x256xf32> to vector<2x256xf32>
    %c0_1 = arith.constant 0 : index
    %c0_2 = arith.constant 0 : index
    %3 = vector.load %arg3[%c0_1, %c0_2] : memref<2x256xf32, #tpu.memory_space<vmem>>, vector<2x256xf32>
    tpu.vector_store %arg3[%c0_1, %c0_2], %2 {strides = array<i32>} : memref<2x256xf32, #tpu.memory_space<vmem>>, vector<2x256xf32>,
    return
  }
  func.func @transform_0(%arg0: i32, %arg1: i32) -> (i32, i32) {
    %c0_i32 = arith.constant 0 : i32
    %c0_i32_0 = arith.constant 0 : i32
    return %c0_i32, %arg0 : i32, i32
  }
  func.func @transform_1(%arg0: i32, %arg1: i32) -> (i32, i32) {
    %c0_i32 = arith.constant 0 : i32
    return %arg1, %arg0 : i32, i32
  }
}

module attributes {stable_mosaic.version = 11 : i64} {
  func.func @_pos_embed_kernel(%arg0: i32, %arg1: i32, %arg2: memref<1x256xf32, #tpu.memory_space<vmem>>, %arg3: memref<2x256xf32, #tpu.memory_space<vmem>>) attributes {dimension_semantics = [#tpu.dimension_semantics<parallel>, #tpu.dimension_semantics<parallel>], iteration_bounds = array<i64: 1, 1>, scalar_prefetch = 0 : i64, scratch_operands = 0 : i64, tpu.core_type = #tpu.core_type<tc>, window_params = [{transform_indices = @transform_0, window_bounds = array<i64: 1, 256>}, {transform_indices = @transform_1, window_bounds = array<i64: 2, 256>}]} {
    %c0 = arith.constant 0 : index
    %c0_0 = arith.constant 0 : index
    %0 = vector.load %arg2[%c0, %c0_0] : memref<1x256xf32, #tpu.memory_space<vmem>>, vector<1x256xf32>
    %1 = vector.shape_cast %0 : vector<1x256xf32> to vector<1x256xf32>
    %2 = vector.broadcast %1 : vector<1x256xf32> to vector<2x256xf32>
    %c0_1 = arith.constant 0 : index
    %c0_2 = arith.constant 0 : index
    %3 = vector.load %arg3[%c0_1, %c0_2] : memref<2x256xf32, #tpu.memory_space<vmem>>, vector<2x256xf32>
    tpu.vector_store %arg3[%c0_1, %c0_2], %2 {strides = array<i32>} : memref<2x256xf32, #tpu.memory_space<vmem>>, vector<2x256xf32>,
    return
  }
  func.func @transform_0(%arg0: i32, %arg1: i32) -> (i32, i32) {
    %c0_i32 = arith.constant 0 : i32
    %c0_i32_0 = arith.constant 0 : i32
    return %c0_i32, %arg0 : i32, i32
  }
  func.func @transform_1(%arg0: i32, %arg1: i32) -> (i32, i32) {
    %c0_i32 = arith.constant 0 : i32
    return %arg1, %arg0 : i32, i32
  }
}

</mosaic_0001>

<llo_original>
// kernel: tpu_custom_call.1
$region0: #{tpu_custom_call.1}
  #allocation0 [shape = 'u32[]', space=smem, size = 0x4, offset = 0x4, fixed_abs, tag = 'smem constant byte address 0x4 - core index']
  #allocation1 [shape = 'u32[144,128]{1,0:T(1,128)}', space=vmem, size = 0x12000, scoped, tag = 'internal scratch']
  %s0 = inlined_call_operand.hbm [shape: f32[1,256], index: 0, kind: input, shape index: {}]
  %s1 = inlined_call_operand.hbm [shape: f32[2,256], index: 1, kind: output, shape index: {}]
  %s2 = sld [smem:[#allocation0]]
  $region18: #{tpu_custom_call.1} parent=0
    _
  %s4 = ssub.s32 1, %s2
  %s5 = scalar_select 0, %s4, %s2
  $region1: #{tpu_custom_call.1} parent=0
    #allocation2 [shape = 'u8[1024]{0}', space=vmem, size = 0x400, scoped, tag = 'input window, operand 0, single buffered']
    #allocation3 [shape = 's32[1]{0}', space=sflag, size = 0x4, scoped, tag = 'scoped memory for tpu_custom_call.1']
    #allocation4 [shape = 's32[1]{0}', space=sflag, size = 0x4, scoped, tag = 'scoped memory for tpu_custom_call.1']
    #allocation5 [shape = 'u8[2048]{0}', space=vmem, size = 0x800, scoped, tag = 'output window, operand 0, single buffered']
    %6 = vsyncpa [#allocation3], 0
    %7 = vsyncpa [#allocation4], 0
    // Predicated region
    $region2: #{tpu_custom_call.1} parent=1 // pred_check
      _
    $region3: #{tpu_custom_call.1} parent=1 // pred_check_branch
      %9 = sbr.rel (0) target = $region5
    $region4: #{tpu_custom_call.1} parent=1 // pred_region
      %s11 = ssub.s32 32, 32
      %12 = vsyncadd [#allocation3], %s11
      %s14 = sshll.u32 [#allocation2], 4
      %s15 = int_to_ptr.vmem [resolvable:$true] %s14
      %17 = dma.hbm_to_vmem [thread:$0]  %s0, 32, %s15, [#allocation3]
    $region5: #{tpu_custom_call.1} parent=1 // pred_fallthru
      _
    // Predicated region
    $region6: #{tpu_custom_call.1} parent=1 // pred_check
      _
    $region7: #{tpu_custom_call.1} parent=1 // pred_check_branch
      %19 = sbr.rel (0) target = $region9
    $region8: #{tpu_custom_call.1} parent=1 // pred_region
      %20 = dma.done [#allocation3], 32
    $region9: #{tpu_custom_call.1} parent=1 // pred_fallthru
      _
    %v21 = vld [vmem:[#allocation2] sm:$0x3]
    %v23 = vlaneseq
    %v24 = vshrl.u32 %v23, 7
    %v25 = vsub.s32 0, %v24
    %v26 = vrot.slane %v21, %v25
    %v27 = vlaneseq
    %v28 = vshrl.u32 %v27, 7
    %v29 = vsub.s32 1, %v28
    %v30 = vrot.slane %v21, %v29
    %v31 = vcombine.low %v26, %v30
    %v33 = vunpack.c.l.s4 1983009808
    %v34 = vunpack.c.0.s8 %v33
    %v35 = vlaneseq
    %v36 = vshrl.u32 %v35, 7
    %v37 = vsub.s32 %v34, %v36
    %v38 = vrot.slane %v31, %v37
    %40 = vst [vmem:[#allocation5] sm:$0xf] %v38
    // Predicated region
    $region10: #{tpu_custom_call.1} parent=1 // pred_check
      _
    $region11: #{tpu_custom_call.1} parent=1 // pred_check_branch
      %42 = sbr.rel (0) target = $region13
    $region12: #{tpu_custom_call.1} parent=1 // pred_region
      %s44 = ssub.s32 64, 64
      %45 = vsyncadd [#allocation4], %s44
      %s47 = sshll.u32 [#allocation5], 4
      %s48 = int_to_ptr.vmem [resolvable:$true] %s47
      %50 = dma.vmem_to_hbm [thread:$0]  %s48, 64, %s1, [#allocation4]
    $region13: #{tpu_custom_call.1} parent=1 // pred_fallthru
      _
    // Predicated region
    $region14: #{tpu_custom_call.1} parent=1 // pred_check
      _
    $region15: #{tpu_custom_call.1} parent=1 // pred_check_branch
      %52 = sbr.rel (0) target = $region17
    $region16: #{tpu_custom_call.1} parent=1 // pred_region
      %53 = dma.done [#allocation4], 64
    $region17: #{tpu_custom_call.1} parent=1 // pred_fallthru
      _
    %54 = vsyncpa [#allocation3], 1
    %55 = vsyncpa [#allocation4], 1

// kernel: tpu_custom_call.1
$region0: #{tpu_custom_call.1}
  #allocation0 [shape = 'u32[]', space=smem, size = 0x4, offset = 0x4, fixed_abs, tag = 'smem constant byte address 0x4 - core index']
  #allocation1 [shape = 'u32[144,128]{1,0:T(1,128)}', space=vmem, size = 0x12000, scoped, tag = 'internal scratch']
  %s0 = inlined_call_operand.hbm [shape: f32[1,256], index: 0, kind: input, shape index: {}]
  %s1 = inlined_call_operand.hbm [shape: f32[2,256], index: 1, kind: output, shape index: {}]
  %s2 = sld [smem:[#allocation0]]
  $region18: #{tpu_custom_call.1} parent=0
    _
  %s4 = ssub.s32 1, %s2
  %s5 = scalar_select 0, %s4, %s2
  $region1: #{tpu_custom_call.1} parent=0
    #allocation2 [shape = 'u8[1024]{0}', space=vmem, size = 0x400, scoped, tag = 'input window, operand 0, single buffered']
    #allocation3 [shape = 's32[1]{0}', space=sflag, size = 0x4, scoped, tag = 'scoped memory for tpu_custom_call.1']
    #allocation4 [shape = 's32[1]{0}', space=sflag, size = 0x4, scoped, tag = 'scoped memory for tpu_custom_call.1']
    #allocation5 [shape = 'u8[2048]{0}', space=vmem, size = 0x800, scoped, tag = 'output window, operand 0, single buffered']
    %6 = vsyncpa [#allocation3], 0
    %7 = vsyncpa [#allocation4], 0
    // Predicated region
    $region2: #{tpu_custom_call.1} parent=1 // pred_check
      _
    $region3: #{tpu_custom_call.1} parent=1 // pred_check_branch
      %9 = sbr.rel (0) target = $region5
    $region4: #{tpu_custom_call.1} parent=1 // pred_region
      %s11 = ssub.s32 32, 32
      %12 = vsyncadd [#allocation3], %s11
      %s14 = sshll.u32 [#allocation2], 4
      %s15 = int_to_ptr.vmem [resolvable:$true] %s14
      %17 = dma.hbm_to_vmem [thread:$0]  %s0, 32, %s15, [#allocation3]
    $region5: #{tpu_custom_call.1} parent=1 // pred_fallthru
      _
    // Predicated region
    $region6: #{tpu_custom_call.1} parent=1 // pred_check
      _
    $region7: #{tpu_custom_call.1} parent=1 // pred_check_branch
      %19 = sbr.rel (0) target = $region9
    $region8: #{tpu_custom_call.1} parent=1 // pred_region
      %20 = dma.done [#allocation3], 32
    $region9: #{tpu_custom_call.1} parent=1 // pred_fallthru
      _
    %v21 = vld [vmem:[#allocation2] sm:$0x3]
    %v23 = vlaneseq
    %v24 = vshrl.u32 %v23, 7
    %v25 = vsub.s32 0, %v24
    %v26 = vrot.slane %v21, %v25
    %v27 = vlaneseq
    %v28 = vshrl.u32 %v27, 7
    %v29 = vsub.s32 1, %v28
    %v30 = vrot.slane %v21, %v29
    %v31 = vcombine.low %v26, %v30
    %v33 = vunpack.c.l.s4 1983009808
    %v34 = vunpack.c.0.s8 %v33
    %v35 = vlaneseq
    %v36 = vshrl.u32 %v35, 7
    %v37 = vsub.s32 %v34, %v36
    %v38 = vrot.slane %v31, %v37
    %40 = vst [vmem:[#allocation5] sm:$0xf] %v38
    // Predicated region
    $region10: #{tpu_custom_call.1} parent=1 // pred_check
      _
    $region11: #{tpu_custom_call.1} parent=1 // pred_check_branch
      %42 = sbr.rel (0) target = $region13
    $region12: #{tpu_custom_call.1} parent=1 // pred_region
      %s44 = ssub.s32 64, 64
      %45 = vsyncadd [#allocation4], %s44
      %s47 = sshll.u32 [#allocation5], 4
      %s48 = int_to_ptr.vmem [resolvable:$true] %s47
      %50 = dma.vmem_to_hbm [thread:$0]  %s48, 64, %s1, [#allocation4]
    $region13: #{tpu_custom_call.1} parent=1 // pred_fallthru
      _
    // Predicated region
    $region14: #{tpu_custom_call.1} parent=1 // pred_check
      _
    $region15: #{tpu_custom_call.1} parent=1 // pred_check_branch
      %52 = sbr.rel (0) target = $region17
    $region16: #{tpu_custom_call.1} parent=1 // pred_region
      %53 = dma.done [#allocation4], 64
    $region17: #{tpu_custom_call.1} parent=1 // pred_fallthru
      _
    %54 = vsyncpa [#allocation3], 1
    %55 = vsyncpa [#allocation4], 1

</llo_original>
